<compile_context>
chip_gen: v5e
topology: v5e:2x2
jax: 0.10.0
libtpu: 0.0.40
codegen_flags: <defaults>
</compile_context>

<pallas_src>
import functools

import jax
import jax.numpy as jnp
from jax.experimental import pallas as pl
from jax.experimental.pallas import tpu as pltpu


def _round_up(x, m):
    return ((x + m - 1) // m) * m


def _condition_dmodel_kernel(
    x_ref,                 # (TB, Fp)    f32   cat([state, cond], 1) tile (K-padded)
    w_enc_ref, b_enc_ref,  # (Fp, 512)   bf16, (1, 512) f32   block-diag [Ws 0; 0 Wc]
    w1_ref, b1_ref,        # (512, 256)  bf16, (1, 256) f32
    w2_ref, b2_ref,        # (256, 64)   bf16, (1, 64)  f32
    w3_ref, b3_ref,        # (1, 64)     f32,  (1, 1)   f32
    out_ref,               # (TB, 1)     f32
):
    f32 = jnp.float32
    bf16 = jnp.bfloat16

    x = x_ref[...].astype(bf16)

    # Fused encoders: x @ [Ws 0; 0 Wc] == [state@Ws | cond@Wc], then bias+ReLU
    # reproduces cat([ReLU(state@Ws+bs), ReLU(cond@Wc+bc)], 1) exactly.
    sc = jnp.maximum(
        jnp.dot(x, w_enc_ref[...], preferred_element_type=f32) + b_enc_ref[...],
        0.0,
    )

    # fc layer 1 on the (implicitly concatenated) 512-wide activation.
    h1 = jnp.maximum(
        jnp.dot(sc.astype(bf16), w1_ref[...], preferred_element_type=f32)
        + b1_ref[...],
        0.0,
    )

    # fc layer 2.
    h2 = jnp.maximum(
        jnp.dot(h1.astype(bf16), w2_ref[...], preferred_element_type=f32)
        + b2_ref[...],
        0.0,
    )

    # fc layer 3 (64 -> 1, no activation): VPU multiply + XLU lane reduce
    # instead of a severely underfilled N=1 MXU matmul.
    y = jnp.sum(h2 * w3_ref[...], axis=-1, keepdims=True) + b3_ref[...]
    out_ref[...] = y.astype(out_ref.dtype)


@functools.partial(jax.jit, static_argnames=("tb",))
def condition_dmodel_forward(state, condition, params, *, tb=512):
    """state: (B, action_dim), condition: (B, context_dim) -> (B, 1)."""
    B = state.shape[0]
    A = state.shape[1]
    C = condition.shape[1]
    feat = A + C

    bf16 = jnp.bfloat16

    # Concat the two small inputs once in the wrapper (fused away in-kernel
    # via the block-diagonal encoder weight).
    x = jnp.concatenate(
        [state.astype(jnp.float32), condition.astype(jnp.float32)], axis=1
    )

    # Pad the contraction (feature) dim to a sublane multiple; zero rows of
    # the weight / zero cols of x contribute nothing to the matmul.
    feat_pad = _round_up(feat, 8)
    w_enc = params["w_enc"].astype(bf16)
    if feat_pad != feat:
        x = jnp.pad(x, ((0, 0), (0, feat_pad - feat)))
        w_enc = jnp.pad(w_enc, ((0, feat_pad - feat), (0, 0)))

    # Batch tile size: multiple of 8 sublanes; don't over-pad tiny batches.
    tb = min(tb, _round_up(B, 8))
    tb = _round_up(tb, 8)
    b_pad = _round_up(B, tb)
    if b_pad != B:
        x = jnp.pad(x, ((0, b_pad - B), (0, 0)))
    grid = (b_pad // tb,)

    args = (
        x,
        w_enc, params["b_enc"],
        params["w1"].astype(bf16), params["b1"],
        params["w2"].astype(bf16), params["b2"],
        params["w3_row"], params["b3"],
    )

    # Activations move with the grid; weights/biases pin a constant block so
    # they stay VMEM-resident across all grid steps.
    in_specs = [
        pl.BlockSpec((tb, feat_pad), lambda i: (i, 0)),
        pl.BlockSpec((feat_pad, 512), lambda i: (0, 0)),
        pl.BlockSpec((1, 512), lambda i: (0, 0)),
        pl.BlockSpec((512, 256), lambda i: (0, 0)),
        pl.BlockSpec((1, 256), lambda i: (0, 0)),
        pl.BlockSpec((256, 64), lambda i: (0, 0)),
        pl.BlockSpec((1, 64), lambda i: (0, 0)),
        pl.BlockSpec((1, 64), lambda i: (0, 0)),
        pl.BlockSpec((1, 1), lambda i: (0, 0)),
    ]
    out_specs = pl.BlockSpec((tb, 1), lambda i: (i, 0))

    out = pl.pallas_call(
        _condition_dmodel_kernel,
        out_shape=jax.ShapeDtypeStruct((b_pad, 1), jnp.float32),
        grid=grid,
        in_specs=in_specs,
        out_specs=out_specs,
        compiler_params=pltpu.CompilerParams(
            dimension_semantics=("parallel",),
        ),
    )(*args)

    return out[:B]


def init_params(key, state_dim, action_dim, context_dim):
    """Deterministic init mirroring the module's parameter shapes.

    PyTorch Linear stores W as (out, in); we keep (in, out) so the kernel
    does y = x @ W + b.  The two encoder Linears are packed into a single
    block-diagonal (A+C, 512) matrix so cat() is fused away.
    """
    ks = jax.random.split(key, 10)

    def lin(kw, kb, fan_in, fan_out):
        bound = 1.0 / jnp.sqrt(jnp.float32(fan_in))
        w = jax.random.uniform(kw, (fan_in, fan_out), jnp.float32, -bound, bound)
        b = jax.random.uniform(kb, (1, fan_out), jnp.float32, -bound, bound)
        return w, b

    ws, bs = lin(ks[0], ks[1], action_dim, 256)     # state_fc (in = action_dim)
    wc, bc = lin(ks[2], ks[3], context_dim, 256)    # condition_fc
    w1, b1 = lin(ks[4], ks[5], 512, 256)            # fc[0]
    w2, b2 = lin(ks[6], ks[7], 256, 64)             # fc[2]
    w3, b3 = lin(ks[8], ks[9], 64, 1)               # fc[4]

    w_enc = jnp.zeros((action_dim + context_dim, 512), jnp.float32)
    w_enc = w_enc.at[:action_dim, :256].set(ws)
    w_enc = w_enc.at[action_dim:, 256:].set(wc)
    b_enc = jnp.concatenate([bs, bc], axis=1)

    return {
        "w_enc": w_enc, "b_enc": b_enc,   # fused encoders
        "w1": w1, "b1": b1,
        "w2": w2, "b2": b2,
        "w3_row": w3.T,                   # (1, 64)
        "b3": b3,                         # (1, 1)
    }


def _reference_forward(state, condition, p):
    """Original PyTorch topology (separate encoders + concat), using the same
    bf16-operand / f32-accumulate matmul math as the kernel."""
    f32, bf16 = jnp.float32, jnp.bfloat16
    relu = lambda v: jnp.maximum(v, 0.0)
    A = state.shape[1]
    ws, wc = p["w_enc"][:A, :256], p["w_enc"][A:, 256:]
    bs, bc = p["b_enc"][:, :256], p["b_enc"][:, 256:]

    s = relu(jnp.dot(state.astype(bf16), ws.astype(bf16),
                     preferred_element_type=f32) + bs)
    c = relu(jnp.dot(condition.astype(bf16), wc.astype(bf16),
                     preferred_element_type=f32) + bc)
    h = jnp.concatenate([s, c], axis=1)
    h = relu(jnp.dot(h.astype(bf16), p["w1"].astype(bf16),
                     preferred_element_type=f32) + p["b1"])
    h = relu(jnp.dot(h.astype(bf16), p["w2"].astype(bf16),
                     preferred_element_type=f32) + p["b2"])
    return jnp.dot(h, p["w3_row"].T) + p["b3"]


if __name__ == "__main__":
    state_dim, action_dim, context_dim = 4, 4, 6
    batch = 200          # non-multiple of the tile -> exercises padding path
    tile = 64            # small tile so the demo runs a multi-step grid

    key = jax.random.PRNGKey(0)
    k_params, k_state, k_cond = jax.random.split(key, 3)

    params = init_params(k_params, state_dim, action_dim, context_dim)
    # forward(state, condition): state_fc consumes `state` with width action_dim
    state = jax.random.normal(k_state, (batch, action_dim), jnp.float32)
    condition = jax.random.normal(k_cond, (batch, context_dim), jnp.float32)

    out = condition_dmodel_forward(state, condition, params, tb=tile)
    out = jax.block_until_ready(out)

    ref = _reference_forward(state, condition, params)
    assert out.shape == (batch, 1), out.shape
    assert jnp.allclose(out, ref, atol=1e-2, rtol=1e-2), (
        float(jnp.max(jnp.abs(out - ref)))
    )
    print("KERNEL_OK")
</pallas_src>

<mosaic_0001>
module attributes {stable_mosaic.version = 11 : i64} {
  func.func @_condition_dmodel_kernel(%arg0: i32, %arg1: memref<64x16xf32, #tpu.memory_space<vmem>>, %arg2: memref<16x512xbf16, #tpu.memory_space<vmem>>, %arg3: memref<1x512xf32, #tpu.memory_space<vmem>>, %arg4: memref<512x256xbf16, #tpu.memory_space<vmem>>, %arg5: memref<1x256xf32, #tpu.memory_space<vmem>>, %arg6: memref<256x64xbf16, #tpu.memory_space<vmem>>, %arg7: memref<1x64xf32, #tpu.memory_space<vmem>>, %arg8: memref<1x64xf32, #tpu.memory_space<vmem>>, %arg9: memref<1x1xf32, #tpu.memory_space<vmem>>, %arg10: memref<64x1xf32, #tpu.memory_space<vmem>>) attributes {dimension_semantics = [#tpu.dimension_semantics<parallel>], iteration_bounds = array<i64: 4>, scalar_prefetch = 0 : i64, scratch_operands = 0 : i64, tpu.core_type = #tpu.core_type<tc>, window_params = [{transform_indices = @transform_0, window_bounds = array<i64: 64, 16>}, {pipeline_mode = #tpu.pipeline_mode<synchronous>, transform_indices = @transform_1, window_bounds = array<i64: 16, 512>}, {pipeline_mode = #tpu.pipeline_mode<synchronous>, transform_indices = @transform_2, window_bounds = array<i64: 1, 512>}, {pipeline_mode = #tpu.pipeline_mode<synchronous>, transform_indices = @transform_3, window_bounds = array<i64: 512, 256>}, {pipeline_mode = #tpu.pipeline_mode<synchronous>, transform_indices = @transform_4, window_bounds = array<i64: 1, 256>}, {pipeline_mode = #tpu.pipeline_mode<synchronous>, transform_indices = @transform_5, window_bounds = array<i64: 256, 64>}, {pipeline_mode = #tpu.pipeline_mode<synchronous>, transform_indices = @transform_6, window_bounds = array<i64: 1, 64>}, {pipeline_mode = #tpu.pipeline_mode<synchronous>, transform_indices = @transform_7, window_bounds = array<i64: 1, 64>}, {pipeline_mode = #tpu.pipeline_mode<synchronous>, transform_indices = @transform_8, window_bounds = array<i64: 1, 1>}, {transform_indices = @transform_9, window_bounds = array<i64: 64, 1>}]} {
    %c0 = arith.constant 0 : index
    %c0_0 = arith.constant 0 : index
    %0 = vector.load %arg1[%c0, %c0_0] : memref<64x16xf32, #tpu.memory_space<vmem>>, vector<64x16xf32>
    %1 = arith.truncf %0 : vector<64x16xf32> to vector<64x16xbf16>
    %c0_1 = arith.constant 0 : index
    %c0_2 = arith.constant 0 : index
    %2 = vector.load %arg2[%c0_1, %c0_2] : memref<16x512xbf16, #tpu.memory_space<vmem>>, vector<16x512xbf16>
    %cst = arith.constant dense<0.000000e+00> : vector<64x512xf32>
    %3 = tpu.matmul %1, %2, %cst {dimension_numbers = #tpu.dot_dimension_numbers<[1], [0], [0], [1], [0, 0, 1, 1], [], []>} : vector<64x16xbf16>, vector<16x512xbf16>, vector<64x512xf32> -> vector<64x512xf32>
    %c0_3 = arith.constant 0 : index
    %c0_4 = arith.constant 0 : index
    %4 = vector.load %arg3[%c0_3, %c0_4] : memref<1x512xf32, #tpu.memory_space<vmem>>, vector<1x512xf32>
    %5 = vector.broadcast %4 : vector<1x512xf32> to vector<64x512xf32>
    %6 = arith.addf %3, %5 : vector<64x512xf32>
    %cst_5 = arith.constant 0.000000e+00 : f32
    %7 = vector.broadcast %cst_5 : f32 to vector<64x512xf32>
    %8 = arith.maximumf %6, %7 : vector<64x512xf32>
    %9 = arith.truncf %8 : vector<64x512xf32> to vector<64x512xbf16>
    %c0_6 = arith.constant 0 : index
    %c0_7 = arith.constant 0 : index
    %10 = vector.load %arg4[%c0_6, %c0_7] : memref<512x256xbf16, #tpu.memory_space<vmem>>, vector<512x256xbf16>
    %cst_8 = arith.constant dense<0.000000e+00> : vector<64x256xf32>
    %11 = tpu.matmul %9, %10, %cst_8 {dimension_numbers = #tpu.dot_dimension_numbers<[1], [0], [0], [1], [0, 0, 1, 1], [], []>} : vector<64x512xbf16>, vector<512x256xbf16>, vector<64x256xf32> -> vector<64x256xf32>
    %c0_9 = arith.constant 0 : index
    %c0_10 = arith.constant 0 : index
    %12 = vector.load %arg5[%c0_9, %c0_10] : memref<1x256xf32, #tpu.memory_space<vmem>>, vector<1x256xf32>
    %13 = vector.broadcast %12 : vector<1x256xf32> to vector<64x256xf32>
    %14 = arith.addf %11, %13 : vector<64x256xf32>
    %cst_11 = arith.constant 0.000000e+00 : f32
    %15 = vector.broadcast %cst_11 : f32 to vector<64x256xf32>
    %16 = arith.maximumf %14, %15 : vector<64x256xf32>
    %17 = arith.truncf %16 : vector<64x256xf32> to vector<64x256xbf16>
    %c0_12 = arith.constant 0 : index
    %c0_13 = arith.constant 0 : index
    %18 = vector.load %arg6[%c0_12, %c0_13] : memref<256x64xbf16, #tpu.memory_space<vmem>>, vector<256x64xbf16>
    %cst_14 = arith.constant dense<0.000000e+00> : vector<64x64xf32>
    %19 = tpu.matmul %17, %18, %cst_14 {dimension_numbers = #tpu.dot_dimension_numbers<[1], [0], [0], [1], [0, 0, 1, 1], [], []>} : vector<64x256xbf16>, vector<256x64xbf16>, vector<64x64xf32> -> vector<64x64xf32>
    %c0_15 = arith.constant 0 : index
    %c0_16 = arith.constant 0 : index
    %20 = vector.load %arg7[%c0_15, %c0_16] : memref<1x64xf32, #tpu.memory_space<vmem>>, vector<1x64xf32>
    %21 = vector.broadcast %20 : vector<1x64xf32> to vector<64x64xf32>
    %22 = arith.addf %19, %21 : vector<64x64xf32>
    %cst_17 = arith.constant 0.000000e+00 : f32
    %23 = vector.broadcast %cst_17 : f32 to vector<64x64xf32>
    %24 = arith.maximumf %22, %23 : vector<64x64xf32>
    %c0_18 = arith.constant 0 : index
    %c0_19 = arith.constant 0 : index
    %25 = vector.load %arg8[%c0_18, %c0_19] : memref<1x64xf32, #tpu.memory_space<vmem>>, vector<1x64xf32>
    %26 = vector.broadcast %25 : vector<1x64xf32> to vector<64x64xf32>
    %27 = arith.mulf %24, %26 : vector<64x64xf32>
    %cst_20 = arith.constant dense<0.000000e+00> : vector<64xf32>
    %28 = vector.multi_reduction <add>, %27, %cst_20 [1] : vector<64x64xf32> to vector<64xf32>
    %29 = vector.shape_cast %28 : vector<64xf32> to vector<64x1xf32>
    %c0_21 = arith.constant 0 : index
    %c0_22 = arith.constant 0 : index
    %30 = vector.load %arg9[%c0_21, %c0_22] : memref<1x1xf32, #tpu.memory_space<vmem>>, vector<1x1xf32>
    %31 = vector.broadcast %30 : vector<1x1xf32> to vector<64x1xf32>
    %32 = arith.addf %29, %31 : vector<64x1xf32>
    %c0_23 = arith.constant 0 : index
    %c0_24 = arith.constant 0 : index
    %33 = vector.load %arg10[%c0_23, %c0_24] : memref<64x1xf32, #tpu.memory_space<vmem>>, vector<64x1xf32>
    tpu.vector_store %arg10[%c0_23, %c0_24], %32 {strides = array<i32>} : memref<64x1xf32, #tpu.memory_space<vmem>>, vector<64x1xf32>,
    return
  }
  func.func @transform_0(%arg0: i32) -> (i32, i32) {
    %c0_i32 = arith.constant 0 : i32
    %c0_i32_0 = arith.constant 0 : i32
    return %arg0, %c0_i32 : i32, i32
  }
  func.func @transform_1(%arg0: i32) -> (i32, i32) {
    %c0_i32 = arith.constant 0 : i32
    %c0_i32_0 = arith.constant 0 : i32
    %c0_i32_1 = arith.constant 0 : i32
    return %c0_i32, %c0_i32_0 : i32, i32
  }
  func.func @transform_2(%arg0: i32) -> (i32, i32) {
    %c0_i32 = arith.constant 0 : i32
    %c0_i32_0 = arith.constant 0 : i32
    %c0_i32_1 = arith.constant 0 : i32
    return %c0_i32, %c0_i32_0 : i32, i32
  }
  func.func @transform_3(%arg0: i32) -> (i32, i32) {
    %c0_i32 = arith.constant 0 : i32
    %c0_i32_0 = arith.constant 0 : i32
    %c0_i32_1 = arith.constant 0 : i32
    return %c0_i32, %c0_i32_0 : i32, i32
  }
  func.func @transform_4(%arg0: i32) -> (i32, i32) {
    %c0_i32 = arith.constant 0 : i32
    %c0_i32_0 = arith.constant 0 : i32
    %c0_i32_1 = arith.constant 0 : i32
    return %c0_i32, %c0_i32_0 : i32, i32
  }
  func.func @transform_5(%arg0: i32) -> (i32, i32) {
    %c0_i32 = arith.constant 0 : i32
    %c0_i32_0 = arith.constant 0 : i32
    %c0_i32_1 = arith.constant 0 : i32
    return %c0_i32, %c0_i32_0 : i32, i32
  }
  func.func @transform_6(%arg0: i32) -> (i32, i32) {
    %c0_i32 = arith.constant 0 : i32
    %c0_i32_0 = arith.constant 0 : i32
    %c0_i32_1 = arith.constant 0 : i32
    return %c0_i32, %c0_i32_0 : i32, i32
  }
  func.func @transform_7(%arg0: i32) -> (i32, i32) {
    %c0_i32 = arith.constant 0 : i32
    %c0_i32_0 = arith.constant 0 : i32
    %c0_i32_1 = arith.constant 0 : i32
    return %c0_i32, %c0_i32_0 : i32, i32
  }
  func.func @transform_8(%arg0: i32) -> (i32, i32) {
    %c0_i32 = arith.constant 0 : i32
    %c0_i32_0 = arith.constant 0 : i32
    %c0_i32_1 = arith.constant 0 : i32
    return %c0_i32, %c0_i32_0 : i32, i32
  }
  func.func @transform_9(%arg0: i32) -> (i32, i32) {
    %c0_i32 = arith.constant 0 : i32
    %c0_i32_0 = arith.constant 0 : i32
    return %arg0, %c0_i32 : i32, i32
  }
}

</mosaic_0001>

<llo_original>
// kernel: condition_dmodel_forward.1
$region0: #{condition_dmodel_forward.1}
  #allocation0 [shape = 'u32[]', space=smem, size = 0x4, offset = 0x4, fixed_abs, tag = 'smem constant byte address 0x4 - core index']
  #allocation1 [shape = 'u32[72,128]{1,0:T(1,128)}', space=vmem, size = 0x9000, scoped, tag = 'internal scratch']
  #allocation2 [shape = 'f32[1,1]{1,0:T(1,128)S(1)}', space=vmem, size = 0x200, scoped, tag = 'scoped memory for condition_dmodel_forward.1']
  %s0 = inlined_call_operand.vmem [shape: f32[256,16], index: 0, kind: input, shape index: {}]
  %s1 = inlined_call_operand.vmem [shape: bf16[16,512], index: 1, kind: input, shape index: {}]
  %s2 = inlined_call_operand.vmem [shape: f32[1,512], index: 2, kind: input, shape index: {}]
  %s3 = inlined_call_operand.vmem [shape: bf16[512,256], index: 3, kind: input, shape index: {}]
  %s4 = inlined_call_operand.vmem [shape: f32[1,256], index: 4, kind: input, shape index: {}]
  %s5 = inlined_call_operand.vmem [shape: bf16[256,64], index: 5, kind: input, shape index: {}]
  %s6 = inlined_call_operand.vmem [shape: f32[1,64], index: 6, kind: input, shape index: {}]
  %s7 = inlined_call_operand.vmem [shape: f32[1,64], index: 7, kind: input, shape index: {}]
  %s8 = inlined_call_operand.<no memory space> [shape: f32[1,1], index: 8, kind: input, shape index: {}]
  %s9 = inlined_call_operand.vmem [shape: f32[256,1], index: 9, kind: output, shape index: {}]
  %s10 = sld [smem:[#allocation0]]
  $region69: #{condition_dmodel_forward.1} parent=0
    _
  %s12 = ssub.s32 1, %s10
  %s13 = scalar_select 0, %s12, %s10
  %v14 = vstv %s8
  %15 = vst [vmem:[#allocation2] sm:$0x1] %v14
  loop: start=0, step=1, limit=6
  $region2: #{condition_dmodel_forward.1} parent=0 // loop_pre_header
    _
  $region3: #{condition_dmodel_forward.1} parent=0 // loop_header
    %s17 = sphi 0, %s21
    %p18 = scmp.ge.s32.totalorder %s17, 6
    %s27 = sphi 0, %s29
    %s30 = sphi 0, %s27
    %s31 = sphi 0, %s30
    %s47 = sphi 0, %s31
    %s51 = sphi 0, %s51
    %s53 = sphi 0, %s51
    %s54 = sphi 0, %s53
    %s68 = sphi 0, %s54
    %s72 = sphi 0, %s72
    %s74 = sphi 0, %s72
    %s75 = sphi 0, %s74
    %s89 = sphi 0, %s75
    %s93 = sphi 0, %s93
    %s95 = sphi 0, %s93
    %s96 = sphi 0, %s95
    %s110 = sphi 0, %s96
    %s114 = sphi 0, %s114
    %s116 = sphi 0, %s114
    %s117 = sphi 0, %s116
    %s131 = sphi 0, %s117
    %s135 = sphi 0, %s135
    %s137 = sphi 0, %s135
    %s138 = sphi 0, %s137
    %s152 = sphi 0, %s138
    %s156 = sphi 0, %s156
    %s158 = sphi 0, %s156
    %s159 = sphi 0, %s158
    %s173 = sphi 0, %s159
    %s177 = sphi 0, %s177
    %s179 = sphi 0, %s177
    %s180 = sphi 0, %s179
    %s194 = sphi 0, %s180
    %s198 = sphi 0, %s198
    %s200 = sphi 0, %s198
    %s201 = sphi 0, %s200
    %s215 = sphi 0, %s201
    %s221 = sphi 0, %s223
    %s224 = sphi 0, %s221
    %s225 = sphi 0, %s224
    %s241 = sphi 0, %s225
  $region4: #{condition_dmodel_forward.1} parent=0 // loop_header_branch
    %20 = sbr.rel (%p18) target = $region8
  $region5: #{condition_dmodel_forward.1} parent=0 // loop_body
    %s22 = ssub.s32 %s17, 1
    %s23 = ssub.s32 %s17, 2
    %s24 = sadd.s32 %s17, 1
    %s25 = ssub.s32 %s17, %s24
    %p26 = scmp.eq.s32.totalorder %s25, 0
    %s28 = sadd.s32 %s27, 1
    %s29 = scalar_select %p26, %s27, %s28
    %p32 = pneg %p26
    %p33 = scmp.eq.s32.totalorder %s17, 3
    %p34 = por %p32, %p33
    %p35 = scmp.ne.s32.totalorder %s27, %s30
    %p36 = scmp.eq.s32.totalorder %s17, 0
    %p37 = por %p35, %p36
    %p38 = scmp.ne.s32.totalorder %s27, %s30
    %p39 = scmp.eq.s32.totalorder %s22, 3
    %p40 = por %p38, %p39
    %p41 = scmp.ne.s32.totalorder %s30, %s31
    %p42 = scmp.eq.s32.totalorder %s22, 0
    %p43 = por %p41, %p42
    %p44 = scmp.ne.s32.totalorder %s30, %s31
    %p45 = scmp.eq.s32.totalorder %s23, 3
    %p46 = por %p44, %p45
    %p48 = scmp.ne.s32.totalorder %s31, %s47
    %p49 = scmp.eq.s32.totalorder %s23, 0
    %p50 = por %p48, %p49
    %s52 = sadd.s32 %s51, 1
    %p55 = scmp.eq.s32.totalorder %s17, 3
    %p56 = scmp.ne.s32.totalorder %s51, %s53
    %p57 = scmp.eq.s32.totalorder %s17, 0
    %p58 = por %p56, %p57
    %p59 = scmp.ne.s32.totalorder %s51, %s53
    %p60 = scmp.eq.s32.totalorder %s22, 3
    %p61 = por %p59, %p60
    %p62 = scmp.ne.s32.totalorder %s53, %s54
    %p63 = scmp.eq.s32.totalorder %s22, 0
    %p64 = por %p62, %p63
    %p65 = scmp.ne.s32.totalorder %s53, %s54
    %p66 = scmp.eq.s32.totalorder %s23, 3
    %p67 = por %p65, %p66
    %p69 = scmp.ne.s32.totalorder %s54, %s68
    %p70 = scmp.eq.s32.totalorder %s23, 0
    %p71 = por %p69, %p70
    %s73 = sadd.s32 %s72, 1
    %p76 = scmp.eq.s32.totalorder %s17, 3
    %p77 = scmp.ne.s32.totalorder %s72, %s74
    %p78 = scmp.eq.s32.totalorder %s17, 0
    %p79 = por %p77, %p78
    %p80 = scmp.ne.s32.totalorder %s72, %s74
    %p81 = scmp.eq.s32.totalorder %s22, 3
    %p82 = por %p80, %p81
    %p83 = scmp.ne.s32.totalorder %s74, %s75
    %p84 = scmp.eq.s32.totalorder %s22, 0
    %p85 = por %p83, %p84
    %p86 = scmp.ne.s32.totalorder %s74, %s75
    %p87 = scmp.eq.s32.totalorder %s23, 3
    %p88 = por %p86, %p87
    %p90 = scmp.ne.s32.totalorder %s75, %s89
    %p91 = scmp.eq.s32.totalorder %s23, 0
    %p92 = por %p90, %p91
    %s94 = sadd.s32 %s93, 1
    %p97 = scmp.eq.s32.totalorder %s17, 3
    %p98 = scmp.ne.s32.totalorder %s93, %s95
    %p99 = scmp.eq.s32.totalorder %s17, 0
    %p100 = por %p98, %p99
    %p101 = scmp.ne.s32.totalorder %s93, %s95
    %p102 = scmp.eq.s32.totalorder %s22, 3
    %p103 = por %p101, %p102
    %p104 = scmp.ne.s32.totalorder %s95, %s96
    %p105 = scmp.eq.s32.totalorder %s22, 0
    %p106 = por %p104, %p105
    %p107 = scmp.ne.s32.totalorder %s95, %s96
    %p108 = scmp.eq.s32.totalorder %s23, 3
    %p109 = por %p107, %p108
    %p111 = scmp.ne.s32.totalorder %s96, %s110
    %p112 = scmp.eq.s32.totalorder %s23, 0
    %p113 = por %p111, %p112
    %s115 = sadd.s32 %s114, 1
    %p118 = scmp.eq.s32.totalorder %s17, 3
    %p119 = scmp.ne.s32.totalorder %s114, %s116
    %p120 = scmp.eq.s32.totalorder %s17, 0
    %p121 = por %p119, %p120
    %p122 = scmp.ne.s32.totalorder %s114, %s116
    %p123 = scmp.eq.s32.totalorder %s22, 3
    %p124 = por %p122, %p123
    %p125 = scmp.ne.s32.totalorder %s116, %s117
    %p126 = scmp.eq.s32.totalorder %s22, 0
    %p127 = por %p125, %p126
    %p128 = scmp.ne.s32.totalorder %s116, %s117
    %p129 = scmp.eq.s32.totalorder %s23, 3
    %p130 = por %p128, %p129
    %p132 = scmp.ne.s32.totalorder %s117, %s131
    %p133 = scmp.eq.s32.totalorder %s23, 0
    %p134 = por %p132, %p133
    %s136 = sadd.s32 %s135, 1
    %p139 = scmp.eq.s32.totalorder %s17, 3
    %p140 = scmp.ne.s32.totalorder %s135, %s137
    %p141 = scmp.eq.s32.totalorder %s17, 0
    %p142 = por %p140, %p141
    %p143 = scmp.ne.s32.totalorder %s135, %s137
    %p144 = scmp.eq.s32.totalorder %s22, 3
    %p145 = por %p143, %p144
    %p146 = scmp.ne.s32.totalorder %s137, %s138
    %p147 = scmp.eq.s32.totalorder %s22, 0
    %p148 = por %p146, %p147
    %p149 = scmp.ne.s32.totalorder %s137, %s138
    %p150 = scmp.eq.s32.totalorder %s23, 3
    %p151 = por %p149, %p150
    %p153 = scmp.ne.s32.totalorder %s138, %s152
    %p154 = scmp.eq.s32.totalorder %s23, 0
    %p155 = por %p153, %p154
    %s157 = sadd.s32 %s156, 1
    %p160 = scmp.eq.s32.totalorder %s17, 3
    %p161 = scmp.ne.s32.totalorder %s156, %s158
    %p162 = scmp.eq.s32.totalorder %s17, 0
    %p163 = por %p161, %p162
    %p164 = scmp.ne.s32.totalorder %s156, %s158
    %p165 = scmp.eq.s32.totalorder %s22, 3
    %p166 = por %p164, %p165
    %p167 = scmp.ne.s32.totalorder %s158, %s159
    %p168 = scmp.eq.s32.totalorder %s22, 0
    %p169 = por %p167, %p168
    %p170 = scmp.ne.s32.totalorder %s158, %s159
    %p171 = scmp.eq.s32.totalorder %s23, 3
    %p172 = por %p170, %p171
    %p174 = scmp.ne.s32.totalorder %s159, %s173
    %p175 = scmp.eq.s32.totalorder %s23, 0
    %p176 = por %p174, %p175
    %s178 = sadd.s32 %s177, 1
    %p181 = scmp.eq.s32.totalorder %s17, 3
    %p182 = scmp.ne.s32.totalorder %s177, %s179
    %p183 = scmp.eq.s32.totalorder %s17, 0
    %p184 = por %p182, %p183
    %p185 = scmp.ne.s32.totalorder %s177, %s179
    %p186 = scmp.eq.s32.totalorder %s22, 3
    %p187 = por %p185, %p186
    %p188 = scmp.ne.s32.totalorder %s179, %s180
    %p189 = scmp.eq.s32.totalorder %s22, 0
    %p190 = por %p188, %p189
    %p191 = scmp.ne.s32.totalorder %s179, %s180
    %p192 = scmp.eq.s32.totalorder %s23, 3
    %p193 = por %p191, %p192
    %p195 = scmp.ne.s32.totalorder %s180, %s194
    %p196 = scmp.eq.s32.totalorder %s23, 0
    %p197 = por %p195, %p196
    %s199 = sadd.s32 %s198, 1
    %p202 = scmp.eq.s32.totalorder %s17, 3
    %p203 = scmp.ne.s32.totalorder %s198, %s200
    %p204 = scmp.eq.s32.totalorder %s17, 0
    %p205 = por %p203, %p204
    %p206 = scmp.ne.s32.totalorder %s198, %s200
    %p207 = scmp.eq.s32.totalorder %s22, 3
    %p208 = por %p206, %p207
    %p209 = scmp.ne.s32.totalorder %s200, %s201
    %p210 = scmp.eq.s32.totalorder %s22, 0
    %p211 = por %p209, %p210
    %p212 = scmp.ne.s32.totalorder %s200, %s201
    %p213 = scmp.eq.s32.totalorder %s23, 3
    %p214 = por %p212, %p213
    %p216 = scmp.ne.s32.totalorder %s201, %s215
    %p217 = scmp.eq.s32.totalorder %s23, 0
    %p218 = por %p216, %p217
    %s219 = ssub.s32 %s17, %s24
    %p220 = scmp.eq.s32.totalorder %s219, 0
    %s222 = sadd.s32 %s221, 1
    %s223 = scalar_select %p220, %s221, %s222
    %p226 = pneg %p220
    %p227 = scmp.eq.s32.totalorder %s17, 3
    %p228 = por %p226, %p227
    %p229 = scmp.ne.s32.totalorder %s221, %s224
    %p230 = scmp.eq.s32.totalorder %s17, 0
    %p231 = por %p229, %p230
    %p232 = scmp.ne.s32.totalorder %s221, %s224
    %p233 = scmp.eq.s32.totalorder %s22, 3
    %p234 = por %p232, %p233
    %p235 = scmp.ne.s32.totalorder %s224, %s225
    %p236 = scmp.eq.s32.totalorder %s22, 0
    %p237 = por %p235, %p236
    %p238 = scmp.ne.s32.totalorder %s224, %s225
    %p239 = scmp.eq.s32.totalorder %s23, 3
    %p240 = por %p238, %p239
    %p242 = scmp.ne.s32.totalorder %s225, %s241
    %p243 = scmp.eq.s32.totalorder %s23, 0
    %p244 = por %p242, %p243
    %p245 = scmp.le.s32.totalorder 1, %s17
    %p246 = scmp.lt.s32.totalorder %s17, 5
    %p247 = pnand %p245, %p246
    %p248 = pneg %p247
    // Predicated region
    $region9: #{condition_dmodel_forward.1} parent=5 // pred_check
      _
    $region10: #{condition_dmodel_forward.1} parent=5 // pred_check_branch
      %250 = sbr.rel (%p247) target = $region12
    $region11: #{condition_dmodel_forward.1} parent=5 // pred_region
      %s251 = ssub.s32 %s17, 1
      // Predicated region
      $region13: #{condition_dmodel_forward.1} parent=11 // pred_check
        %p252 = pneg %p64
      $region14: #{condition_dmodel_forward.1} parent=11 // pred_check_branch
        %254 = sbr.rel (%p252) target = $region16
      $region15: #{condition_dmodel_forward.1} parent=11 // pred_region
        _
      $region16: #{condition_dmodel_forward.1} parent=11 // pred_fallthru
        _
      // Predicated region
      $region17: #{condition_dmodel_forward.1} parent=11 // pred_check
        %p255 = pneg %p85
      $region18: #{condition_dmodel_forward.1} parent=11 // pred_check_branch
        %257 = sbr.rel (%p255) target = $region20
      $region19: #{condition_dmodel_forward.1} parent=11 // pred_region
        _
      $region20: #{condition_dmodel_forward.1} parent=11 // pred_fallthru
        _
      // Predicated region
      $region21: #{condition_dmodel_forward.1} parent=11 // pred_check
        %p258 = pneg %p106
      $region22: #{condition_dmodel_forward.1} parent=11 // pred_check_branch
        %260 = sbr.rel (%p258) target = $region24
      $region23: #{condition_dmodel_forward.1} parent=11 // pred_region
        _
      $region24: #{condition_dmodel_forward.1} parent=11 // pred_fallthru
        _
      // Predicated region
      $region25: #{condition_dmodel_forward.1} parent=11 // pred_check
        %p261 = pneg %p127
      $region26: #{condition_dmodel_forward.1} parent=11 // pred_check_branch
        %263 = sbr.rel (%p261) target = $region28
      $region27: #{condition_dmodel_forward.1} parent=11 // pred_region
        _
      $region28: #{condition_dmodel_forward.1} parent=11 // pred_fallthru
        _
      // Predicated region
      $region29: #{condition_dmodel_forward.1} parent=11 // pred_check
        %p264 = pneg %p148
      $region30: #{condition_dmodel_forward.1} parent=11 // pred_check_branch
        %266 = sbr.rel (%p264) target = $region32
      $region31: #{condition_dmodel_forward.1} parent=11 // pred_region
        _
      $region32: #{condition_dmodel_forward.1} parent=11 // pred_fallthru
        _
      // Predicated region
      $region33: #{condition_dmodel_forward.1} parent=11 // pred_check
        %p267 = pneg %p169
      $region34: #{condition_dmodel_forward.1} parent=11 // pred_check_branch
        %269 = sbr.rel (%p267) target = $region36
      $region35: #{condition_dmodel_forward.1} parent=11 // pred_region
        _
      $region36: #{condition_dmodel_forward.1} parent=11 // pred_fallthru
        _
      // Predicated region
      $region37: #{condition_dmodel_forward.1} parent=11 // pred_check
        %p270 = pneg %p190
      $region38: #{condition_dmodel_forward.1} parent=11 // pred_check_branch
        %272 = sbr.rel (%p270) target = $region40
      $region39: #{condition_dmodel_forward.1} parent=11 // pred_region
        _
      $region40: #{condition_dmodel_forward.1} parent=11 // pred_fallthru
        _
      // Predicated region
      $region41: #{condition_dmodel_forward.1} parent=11 // pred_check
        %p273 = pneg %p211
      $region42: #{condition_dmodel_forward.1} parent=11 // pred_check_branch
        %275 = sbr.rel (%p273) target = $region44
      $region43: #{condition_dmodel_forward.1} parent=11 // pred_region
        _
      $region44: #{condition_dmodel_forward.1} parent=11 // pred_fallthru
        _
    $region12: #{condition_dmodel_forward.1} parent=5 // pred_fallthru
      _
    %p276 = scmp.lt.s32.totalorder %s17, 4
    // Predicated region
    $region45: #{condition_dmodel_forward.1} parent=5 // pred_check
      %p277 = pneg %p276
    $region46: #{condition_dmodel_forward.1} parent=5 // pred_check_branch
      %279 = sbr.rel (%p277) target = $region48
    $region47: #{condition_dmodel_forward.1} parent=5 // pred_region
      // Predicated region
      $region49: #{condition_dmodel_forward.1} parent=47 // pred_check
        %p280 = pneg %p37
      $region50: #{condition_dmodel_forward.1} parent=47 // pred_check_branch
        %282 = sbr.rel (%p280) target = $region52
      $region51: #{condition_dmodel_forward.1} parent=47 // pred_region
        %s283 = smul.u32 8, %s17
        %p284 = scmp.lt.s32.totalorder %s283, 31
        %s285 = scalar_select %p284, %s283, 31
        %s286 = smul.addr %s285, 8
        %s287 = scalar_lea.vmem %s0, %s286
        %s288 = smul.u32 8, %s17
      $region52: #{condition_dmodel_forward.1} parent=47 // pred_fallthru
        _
    $region48: #{condition_dmodel_forward.1} parent=5 // pred_fallthru
      _
    %p289 = scmp.le.s32.totalorder 1, %s17
    %p290 = scmp.lt.s32.totalorder %s17, 5
    %p291 = pnand %p289, %p290
    %p292 = pneg %p291
    // Predicated region
    $region53: #{condition_dmodel_forward.1} parent=5 // pred_check
      _
    $region54: #{condition_dmodel_forward.1} parent=5 // pred_check_branch
      %294 = sbr.rel (%p291) target = $region56
    $region55: #{condition_dmodel_forward.1} parent=5 // pred_region
      %s295 = ssub.s32 %s17, 1
      %s296 = smul.u32 8, %s22
      %p297 = scmp.lt.s32.totalorder %s296, 31
      %s298 = scalar_select %p297, %s296, 31
      %s299 = smul.addr %s298, 8
      %s300 = scalar_lea.vmem %s0, %s299
      %p301 = pneg %p43
      %p302 = pneg %p40
      %p303 = pneg %p64
      %p304 = pneg %p61
      %p305 = pneg %p85
      %p306 = pneg %p82
      %p307 = pneg %p106
      %p308 = pneg %p103
      %p309 = pneg %p127
      %p310 = pneg %p124
      %p311 = pneg %p148
      %p312 = pneg %p145
      %p313 = pneg %p169
      %p314 = pneg %p166
      %p315 = pneg %p190
      %p316 = pneg %p187
      %p317 = pneg %p211
      %p318 = pneg %p208
      %p319 = pneg %p237
      %p320 = pneg %p234
      %s321 = smul.u32 8, %s22
      %p322 = scmp.lt.s32.totalorder %s321, 31
      %s323 = scalar_select %p322, %s321, 31
      %s324 = smul.addr %s323, 8
      %s325 = scalar_lea.vmem %s9, %s324
      %s326 = smul.u32 8, %s22
      %p327 = scmp.lt.s32.totalorder %s326, 31
      %s328 = scalar_select %p327, %s326, 31
      %s329 = smul.addr %s328, 8
      %s330 = scalar_lea.vmem %s0, %s329
      %s331 = smul.u32 8, %s22
      %s332 = smul.u32 8, %s22
      %p333 = scmp.lt.s32.totalorder %s332, 31
      %s334 = scalar_select %p333, %s332, 31
      %s335 = smul.addr %s334, 8
      %s336 = scalar_lea.vmem %s9, %s335
      %s337 = smul.u32 8, %s22
      %v339 = vld [vmem:[%s330] sm:$0xff]
      %v340 = vld [vmem:[%s330 + $0x8] sm:$0xff]
      %v341 = vld [vmem:[%s330 + $0x10] sm:$0xff]
      %v342 = vld [vmem:[%s330 + $0x18] sm:$0xff]
      %v343 = vld [vmem:[%s330 + $0x20] sm:$0xff]
      %v344 = vld [vmem:[%s330 + $0x28] sm:$0xff]
      %v345 = vld [vmem:[%s330 + $0x30] sm:$0xff]
      %v346 = vld [vmem:[%s330 + $0x38] sm:$0xff]
      %v347 = vpack.c.bf16 %v340, %v339
      %v348 = vpack.c.bf16 %v342, %v341
      %v349 = vpack.c.bf16 %v344, %v343
      %v350 = vpack.c.bf16 %v346, %v345
      %v351 = vld [vmem:[%s1] sm:$0xff]
      %v352 = vld [vmem:[%s1 + $0x8] sm:$0xff]
      %v353 = vld [vmem:[%s1 + $0x10] sm:$0xff]
      %v354 = vld [vmem:[%s1 + $0x18] sm:$0xff]
      %v355 = vld [vmem:[%s2] sm:$0xf]
      %v357 = vperm.slane %v355, 0
      %v358 = vperm.slane %v355, 1
      %v359 = vperm.slane %v355, 2
      %v360 = vperm.slane %v355, 3
      %v369 = vunpack.c.l.b16 %v351
      %v370 = vunpack.c.h.b16 %v351
      %v371 = vunpack.c.l.b16 %v352
      %v372 = vunpack.c.h.b16 %v352
      %v373 = vunpack.c.l.b16 %v353
      %v374 = vunpack.c.h.b16 %v353
      %v375 = vunpack.c.l.b16 %v354
      %v376 = vunpack.c.h.b16 %v354
      %v377 = vpack.c.b16 %v373, %v369
      %v378 = vpack.c.b16 %v374, %v370
      %v379 = vpack.c.b16 %v375, %v371
      %v380 = vpack.c.b16 %v376, %v372
      %vm385 = vcmask 130048
      %v387 = vsel %vm385, %v347, 0
      %v390 = vsel %vm385, %v348, 0
      %v393 = vsel %vm385, %v349, 0
      %v396 = vsel %vm385, %v350, 0
      %398 = vmatpush.bf16.msra.mxu0 0
      %399 = vmatpush.bf16.msra.mxu0 0
      %400 = vmatpush.bf16.msra.mxu0 0
      %401 = vmatpush.bf16.msra.mxu0 0
      %402 = vmatpush.bf16.msra.mxu0 0
      %403 = vmatpush.bf16.msra.mxu0 0
      %404 = vmatpush.bf16.msra.mxu0 0
      %405 = vmatpush.bf16.msra.mxu0 %v377
      %406 = vmatmul.bf16.gmra.mxu0 %v387
      %v407 = vpop.f32.mrf.mxu0
      %v408 = vadd.f32 %v357, %v407
      %v409 = vpop.f32.mrf.mxu0
      %v410 = vadd.f32 %v357, %v409
      %411 = vmatmul.bf16.gmra.mxu0 %v390
      %v412 = vpop.f32.mrf.mxu0
      %v413 = vadd.f32 %v357, %v412
      %v414 = vpop.f32.mrf.mxu0
      %v415 = vadd.f32 %v357, %v414
      %416 = vmatmul.bf16.gmra.mxu0 %v393
      %v417 = vpop.f32.mrf.mxu0
      %v418 = vadd.f32 %v357, %v417
      %v419 = vpop.f32.mrf.mxu0
      %v420 = vadd.f32 %v357, %v419
      %421 = vmatmul.bf16.gmra.mxu0 %v396
      %v422 = vpop.f32.mrf.mxu0
      %v423 = vadd.f32 %v357, %v422
      %v424 = vpop.f32.mrf.mxu0
      %v425 = vadd.f32 %v357, %v424
      %426 = vdwg.mxu0
      %427 = vmatpush.bf16.msra.mxu0 0
      %428 = vmatpush.bf16.msra.mxu0 0
      %429 = vmatpush.bf16.msra.mxu0 0
      %430 = vmatpush.bf16.msra.mxu0 0
      %431 = vmatpush.bf16.msra.mxu0 0
      %432 = vmatpush.bf16.msra.mxu0 0
      %433 = vmatpush.bf16.msra.mxu0 0
      %434 = vmatpush.bf16.msra.mxu0 %v378
      %435 = vmatmul.bf16.gmra.mxu0 %v387
      %v436 = vpop.f32.mrf.mxu0
      %v437 = vadd.f32 %v358, %v436
      %v438 = vpop.f32.mrf.mxu0
      %v439 = vadd.f32 %v358, %v438
      %440 = vmatmul.bf16.gmra.mxu0 %v390
      %v441 = vpop.f32.mrf.mxu0
      %v442 = vadd.f32 %v358, %v441
      %v443 = vpop.f32.mrf.mxu0
      %v444 = vadd.f32 %v358, %v443
      %445 = vmatmul.bf16.gmra.mxu0 %v393
      %v446 = vpop.f32.mrf.mxu0
      %v447 = vadd.f32 %v358, %v446
      %v448 = vpop.f32.mrf.mxu0
      %v449 = vadd.f32 %v358, %v448
      %450 = vmatmul.bf16.gmra.mxu0 %v396
      %v451 = vpop.f32.mrf.mxu0
      %v452 = vadd.f32 %v358, %v451
      %v453 = vpop.f32.mrf.mxu0
      %v454 = vadd.f32 %v358, %v453
      %455 = vdwg.mxu0
      %456 = vmatpush.bf16.msra.mxu0 0
      %457 = vmatpush.bf16.msra.mxu0 0
      %458 = vmatpush.bf16.msra.mxu0 0
      %459 = vmatpush.bf16.msra.mxu0 0
      %460 = vmatpush.bf16.msra.mxu0 0
      %461 = vmatpush.bf16.msra.mxu0 0
      %462 = vmatpush.bf16.msra.mxu0 0
      %463 = vmatpush.bf16.msra.mxu0 %v379
      %464 = vmatmul.bf16.gmra.mxu0 %v387
      %v465 = vpop.f32.mrf.mxu0
      %v466 = vadd.f32 %v359, %v465
      %v467 = vpop.f32.mrf.mxu0
      %v468 = vadd.f32 %v359, %v467
      %469 = vmatmul.bf16.gmra.mxu0 %v390
      %v470 = vpop.f32.mrf.mxu0
      %v471 = vadd.f32 %v359, %v470
      %v472 = vpop.f32.mrf.mxu0
      %v473 = vadd.f32 %v359, %v472
      %474 = vmatmul.bf16.gmra.mxu0 %v393
      %v475 = vpop.f32.mrf.mxu0
      %v476 = vadd.f32 %v359, %v475
      %v477 = vpop.f32.mrf.mxu0
      %v478 = vadd.f32 %v359, %v477
      %479 = vmatmul.bf16.gmra.mxu0 %v396
      %v480 = vpop.f32.mrf.mxu0
      %v481 = vadd.f32 %v359, %v480
      %v482 = vpop.f32.mrf.mxu0
      %v483 = vadd.f32 %v359, %v482
      %484 = vdwg.mxu0
      %485 = vmatpush.bf16.msra.mxu0 0
      %486 = vmatpush.bf16.msra.mxu0 0
      %487 = vmatpush.bf16.msra.mxu0 0
      %488 = vmatpush.bf16.msra.mxu0 0
      %489 = vmatpush.bf16.msra.mxu0 0
      %490 = vmatpush.bf16.msra.mxu0 0
      %491 = vmatpush.bf16.msra.mxu0 0
      %492 = vmatpush.bf16.msra.mxu0 %v380
      %493 = vmatmul.bf16.gmra.mxu0 %v387
      %v494 = vpop.f32.mrf.mxu0
      %v495 = vadd.f32 %v360, %v494
      %v496 = vpop.f32.mrf.mxu0
      %v497 = vadd.f32 %v360, %v496
      %498 = vmatmul.bf16.gmra.mxu0 %v390
      %v499 = vpop.f32.mrf.mxu0
      %v500 = vadd.f32 %v360, %v499
      %v501 = vpop.f32.mrf.mxu0
      %v502 = vadd.f32 %v360, %v501
      %503 = vmatmul.bf16.gmra.mxu0 %v393
      %v504 = vpop.f32.mrf.mxu0
      %v505 = vadd.f32 %v360, %v504
      %v506 = vpop.f32.mrf.mxu0
      %v507 = vadd.f32 %v360, %v506
      %508 = vmatmul.bf16.gmra.mxu0 %v396
      %v509 = vpop.f32.mrf.mxu0
      %v510 = vadd.f32 %v360, %v509
      %v511 = vpop.f32.mrf.mxu0
      %v512 = vadd.f32 %v360, %v511
      %513 = vdwg.mxu0
      %v514 = vmax.f32 %v408, 0.0
      %v515 = vmax.f32 %v437, 0.0
      %v516 = vmax.f32 %v466, 0.0
      %v517 = vmax.f32 %v495, 0.0
      %v518 = vmax.f32 %v410, 0.0
      %v519 = vmax.f32 %v439, 0.0
      %v520 = vmax.f32 %v468, 0.0
      %v521 = vmax.f32 %v497, 0.0
      %v522 = vmax.f32 %v413, 0.0
      %v523 = vmax.f32 %v442, 0.0
      %v524 = vmax.f32 %v471, 0.0
      %v525 = vmax.f32 %v500, 0.0
      %v526 = vmax.f32 %v415, 0.0
      %v527 = vmax.f32 %v444, 0.0
      %v528 = vmax.f32 %v473, 0.0
      %v529 = vmax.f32 %v502, 0.0
      %v530 = vmax.f32 %v418, 0.0
      %v531 = vmax.f32 %v447, 0.0
      %v532 = vmax.f32 %v476, 0.0
      %v533 = vmax.f32 %v505, 0.0
      %v534 = vmax.f32 %v420, 0.0
      %v535 = vmax.f32 %v449, 0.0
      %v536 = vmax.f32 %v478, 0.0
      %v537 = vmax.f32 %v507, 0.0
      %v538 = vmax.f32 %v423, 0.0
      %v539 = vmax.f32 %v452, 0.0
      %v540 = vmax.f32 %v481, 0.0
      %v541 = vmax.f32 %v510, 0.0
      %v542 = vmax.f32 %v425, 0.0
      %v543 = vmax.f32 %v454, 0.0
      %v544 = vmax.f32 %v483, 0.0
      %v545 = vmax.f32 %v512, 0.0
      %v546 = vpack.c.bf16 %v518, %v514
      %v547 = vpack.c.bf16 %v519, %v515
      %v548 = vpack.c.bf16 %v520, %v516
      %v549 = vpack.c.bf16 %v521, %v517
      %v550 = vpack.c.bf16 %v526, %v522
      %v551 = vpack.c.bf16 %v527, %v523
      %v552 = vpack.c.bf16 %v528, %v524
      %v553 = vpack.c.bf16 %v529, %v525
      %v554 = vpack.c.bf16 %v534, %v530
      %v555 = vpack.c.bf16 %v535, %v531
      %v556 = vpack.c.bf16 %v536, %v532
      %v557 = vpack.c.bf16 %v537, %v533
      %v558 = vpack.c.bf16 %v542, %v538
      %v559 = vpack.c.bf16 %v543, %v539
      %v560 = vpack.c.bf16 %v544, %v540
      %v561 = vpack.c.bf16 %v545, %v541
      %v562 = vld [vmem:[%s3] sm:$0xff]
      %v563 = vld [vmem:[%s3 + $0x8] sm:$0xff]
      %v564 = vld [vmem:[%s3 + $0x10] sm:$0xff]
      %v565 = vld [vmem:[%s3 + $0x18] sm:$0xff]
      %v566 = vld [vmem:[%s3 + $0x20] sm:$0xff]
      %v567 = vld [vmem:[%s3 + $0x28] sm:$0xff]
      %v568 = vld [vmem:[%s3 + $0x30] sm:$0xff]
      %v569 = vld [vmem:[%s3 + $0x38] sm:$0xff]
      %v570 = vld [vmem:[%s3 + $0x40] sm:$0xff]
      %v571 = vld [vmem:[%s3 + $0x48] sm:$0xff]
      %v572 = vld [vmem:[%s3 + $0x50] sm:$0xff]
      %v573 = vld [vmem:[%s3 + $0x58] sm:$0xff]
      %v574 = vld [vmem:[%s3 + $0x60] sm:$0xff]
      %v575 = vld [vmem:[%s3 + $0x68] sm:$0xff]
      %v576 = vld [vmem:[%s3 + $0x70] sm:$0xff]
      %v577 = vld [vmem:[%s3 + $0x78] sm:$0xff]
      %v578 = vld [vmem:[%s3 + $0x80] sm:$0xff]
      %v579 = vld [vmem:[%s3 + $0x88] sm:$0xff]
      %v580 = vld [vmem:[%s3 + $0x90] sm:$0xff]
      %v581 = vld [vmem:[%s3 + $0x98] sm:$0xff]
      %v582 = vld [vmem:[%s3 + $0xa0] sm:$0xff]
      %v583 = vld [vmem:[%s3 + $0xa8] sm:$0xff]
      %v584 = vld [vmem:[%s3 + $0xb0] sm:$0xff]
      %v585 = vld [vmem:[%s3 + $0xb8] sm:$0xff]
      %v586 = vld [vmem:[%s3 + $0xc0] sm:$0xff]
      %v587 = vld [vmem:[%s3 + $0xc8] sm:$0xff]
      %v588 = vld [vmem:[%s3 + $0xd0] sm:$0xff]
      %v589 = vld [vmem:[%s3 + $0xd8] sm:$0xff]
      %v590 = vld [vmem:[%s3 + $0xe0] sm:$0xff]
      %v591 = vld [vmem:[%s3 + $0xe8] sm:$0xff]
      %v592 = vld [vmem:[%s3 + $0xf0] sm:$0xff]
      %v593 = vld [vmem:[%s3 + $0xf8] sm:$0xff]
      %v594 = vld [vmem:[%s3 + $0x100] sm:$0xff]
      %v595 = vld [vmem:[%s3 + $0x108] sm:$0xff]
      %v596 = vld [vmem:[%s3 + $0x110] sm:$0xff]
      %v597 = vld [vmem:[%s3 + $0x118] sm:$0xff]
      %v598 = vld [vmem:[%s3 + $0x120] sm:$0xff]
      %v599 = vld [vmem:[%s3 + $0x128] sm:$0xff]
      %v600 = vld [vmem:[%s3 + $0x130] sm:$0xff]
      %v601 = vld [vmem:[%s3 + $0x138] sm:$0xff]
      %v602 = vld [vmem:[%s3 + $0x140] sm:$0xff]
      %v603 = vld [vmem:[%s3 + $0x148] sm:$0xff]
      %v604 = vld [vmem:[%s3 + $0x150] sm:$0xff]
      %v605 = vld [vmem:[%s3 + $0x158] sm:$0xff]
      %v606 = vld [vmem:[%s3 + $0x160] sm:$0xff]
      %v607 = vld [vmem:[%s3 + $0x168] sm:$0xff]
      %v608 = vld [vmem:[%s3 + $0x170] sm:$0xff]
      %v609 = vld [vmem:[%s3 + $0x178] sm:$0xff]
      %v610 = vld [vmem:[%s3 + $0x180] sm:$0xff]
      %v611 = vld [vmem:[%s3 + $0x188] sm:$0xff]
      %v612 = vld [vmem:[%s3 + $0x190] sm:$0xff]
      %v613 = vld [vmem:[%s3 + $0x198] sm:$0xff]
      %v614 = vld [vmem:[%s3 + $0x1a0] sm:$0xff]
      %v615 = vld [vmem:[%s3 + $0x1a8] sm:$0xff]
      %v616 = vld [vmem:[%s3 + $0x1b0] sm:$0xff]
      %v617 = vld [vmem:[%s3 + $0x1b8] sm:$0xff]
      %v618 = vld [vmem:[%s3 + $0x1c0] sm:$0xff]
      %v619 = vld [vmem:[%s3 + $0x1c8] sm:$0xff]
      %v620 = vld [vmem:[%s3 + $0x1d0] sm:$0xff]
      %v621 = vld [vmem:[%s3 + $0x1d8] sm:$0xff]
      %v622 = vld [vmem:[%s3 + $0x1e0] sm:$0xff]
      %v623 = vld [vmem:[%s3 + $0x1e8] sm:$0xff]
      %v624 = vld [vmem:[%s3 + $0x1f0] sm:$0xff]
      %v625 = vld [vmem:[%s3 + $0x1f8] sm:$0xff]
      %v626 = vld [vmem:[%s4] sm:$0x3]
      %v628 = vperm.slane %v626, 0
      %v629 = vperm.slane %v626, 1
      %v696 = vunpack.c.l.b16 %v562
      %v697 = vunpack.c.h.b16 %v562
      %v698 = vunpack.c.l.b16 %v563
      %v699 = vunpack.c.h.b16 %v563
      %v700 = vunpack.c.l.b16 %v564
      %v701 = vunpack.c.h.b16 %v564
      %v702 = vunpack.c.l.b16 %v565
      %v703 = vunpack.c.h.b16 %v565
      %v704 = vunpack.c.l.b16 %v566
      %v705 = vunpack.c.h.b16 %v566
      %v706 = vunpack.c.l.b16 %v567
      %v707 = vunpack.c.h.b16 %v567
      %v708 = vunpack.c.l.b16 %v568
      %v709 = vunpack.c.h.b16 %v568
      %v710 = vunpack.c.l.b16 %v569
      %v711 = vunpack.c.h.b16 %v569
      %v712 = vunpack.c.l.b16 %v570
      %v713 = vunpack.c.h.b16 %v570
      %v714 = vunpack.c.l.b16 %v571
      %v715 = vunpack.c.h.b16 %v571
      %v716 = vunpack.c.l.b16 %v572
      %v717 = vunpack.c.h.b16 %v572
      %v718 = vunpack.c.l.b16 %v573
      %v719 = vunpack.c.h.b16 %v573
      %v720 = vunpack.c.l.b16 %v574
      %v721 = vunpack.c.h.b16 %v574
      %v722 = vunpack.c.l.b16 %v575
      %v723 = vunpack.c.h.b16 %v575
      %v724 = vunpack.c.l.b16 %v576
      %v725 = vunpack.c.h.b16 %v576
      %v726 = vunpack.c.l.b16 %v577
      %v727 = vunpack.c.h.b16 %v577
      %v728 = vunpack.c.l.b16 %v578
      %v729 = vunpack.c.h.b16 %v578
      %v730 = vunpack.c.l.b16 %v579
      %v731 = vunpack.c.h.b16 %v579
      %v732 = vunpack.c.l.b16 %v580
      %v733 = vunpack.c.h.b16 %v580
      %v734 = vunpack.c.l.b16 %v581
      %v735 = vunpack.c.h.b16 %v581
      %v736 = vunpack.c.l.b16 %v582
      %v737 = vunpack.c.h.b16 %v582
      %v738 = vunpack.c.l.b16 %v583
      %v739 = vunpack.c.h.b16 %v583
      %v740 = vunpack.c.l.b16 %v584
      %v741 = vunpack.c.h.b16 %v584
      %v742 = vunpack.c.l.b16 %v585
      %v743 = vunpack.c.h.b16 %v585
      %v744 = vunpack.c.l.b16 %v586
      %v745 = vunpack.c.h.b16 %v586
      %v746 = vunpack.c.l.b16 %v587
      %v747 = vunpack.c.h.b16 %v587
      %v748 = vunpack.c.l.b16 %v588
      %v749 = vunpack.c.h.b16 %v588
      %v750 = vunpack.c.l.b16 %v589
      %v751 = vunpack.c.h.b16 %v589
      %v752 = vunpack.c.l.b16 %v590
      %v753 = vunpack.c.h.b16 %v590
      %v754 = vunpack.c.l.b16 %v591
      %v755 = vunpack.c.h.b16 %v591
      %v756 = vunpack.c.l.b16 %v592
      %v757 = vunpack.c.h.b16 %v592
      %v758 = vunpack.c.l.b16 %v593
      %v759 = vunpack.c.h.b16 %v593
      %v760 = vunpack.c.l.b16 %v594
      %v761 = vunpack.c.h.b16 %v594
      %v762 = vunpack.c.l.b16 %v595
      %v763 = vunpack.c.h.b16 %v595
      %v764 = vunpack.c.l.b16 %v596
      %v765 = vunpack.c.h.b16 %v596
      %v766 = vunpack.c.l.b16 %v597
      %v767 = vunpack.c.h.b16 %v597
      %v768 = vunpack.c.l.b16 %v598
      %v769 = vunpack.c.h.b16 %v598
      %v770 = vunpack.c.l.b16 %v599
      %v771 = vunpack.c.h.b16 %v599
      %v772 = vunpack.c.l.b16 %v600
      %v773 = vunpack.c.h.b16 %v600
      %v774 = vunpack.c.l.b16 %v601
      %v775 = vunpack.c.h.b16 %v601
      %v776 = vunpack.c.l.b16 %v602
      %v777 = vunpack.c.h.b16 %v602
      %v778 = vunpack.c.l.b16 %v603
      %v779 = vunpack.c.h.b16 %v603
      %v780 = vunpack.c.l.b16 %v604
      %v781 = vunpack.c.h.b16 %v604
      %v782 = vunpack.c.l.b16 %v605
      %v783 = vunpack.c.h.b16 %v605
      %v784 = vunpack.c.l.b16 %v606
      %v785 = vunpack.c.h.b16 %v606
      %v786 = vunpack.c.l.b16 %v607
      %v787 = vunpack.c.h.b16 %v607
      %v788 = vunpack.c.l.b16 %v608
      %v789 = vunpack.c.h.b16 %v608
      %v790 = vunpack.c.l.b16 %v609
      %v791 = vunpack.c.h.b16 %v609
      %v792 = vunpack.c.l.b16 %v610
      %v793 = vunpack.c.h.b16 %v610
      %v794 = vunpack.c.l.b16 %v611
      %v795 = vunpack.c.h.b16 %v611
      %v796 = vunpack.c.l.b16 %v612
      %v797 = vunpack.c.h.b16 %v612
      %v798 = vunpack.c.l.b16 %v613
      %v799 = vunpack.c.h.b16 %v613
      %v800 = vunpack.c.l.b16 %v614
      %v801 = vunpack.c.h.b16 %v614
      %v802 = vunpack.c.l.b16 %v615
      %v803 = vunpack.c.h.b16 %v615
      %v804 = vunpack.c.l.b16 %v616
      %v805 = vunpack.c.h.b16 %v616
      %v806 = vunpack.c.l.b16 %v617
      %v807 = vunpack.c.h.b16 %v617
      %v808 = vunpack.c.l.b16 %v618
      %v809 = vunpack.c.h.b16 %v618
      %v810 = vunpack.c.l.b16 %v619
      %v811 = vunpack.c.h.b16 %v619
      %v812 = vunpack.c.l.b16 %v620
      %v813 = vunpack.c.h.b16 %v620
      %v814 = vunpack.c.l.b16 %v621
      %v815 = vunpack.c.h.b16 %v621
      %v816 = vunpack.c.l.b16 %v622
      %v817 = vunpack.c.h.b16 %v622
      %v818 = vunpack.c.l.b16 %v623
      %v819 = vunpack.c.h.b16 %v623
      %v820 = vunpack.c.l.b16 %v624
      %v821 = vunpack.c.h.b16 %v624
      %v822 = vunpack.c.l.b16 %v625
      %v823 = vunpack.c.h.b16 %v625
      %v824 = vpack.c.b16 %v698, %v696
      %v825 = vpack.c.b16 %v699, %v697
      %v826 = vpack.c.b16 %v702, %v700
      %v827 = vpack.c.b16 %v703, %v701
      %v828 = vpack.c.b16 %v706, %v704
      %v829 = vpack.c.b16 %v707, %v705
      %v830 = vpack.c.b16 %v710, %v708
      %v831 = vpack.c.b16 %v711, %v709
      %v832 = vpack.c.b16 %v714, %v712
      %v833 = vpack.c.b16 %v715, %v713
      %v834 = vpack.c.b16 %v718, %v716
      %v835 = vpack.c.b16 %v719, %v717
      %v836 = vpack.c.b16 %v722, %v720
      %v837 = vpack.c.b16 %v723, %v721
      %v838 = vpack.c.b16 %v726, %v724
      %v839 = vpack.c.b16 %v727, %v725
      %v840 = vpack.c.b16 %v730, %v728
      %v841 = vpack.c.b16 %v731, %v729
      %v842 = vpack.c.b16 %v734, %v732
      %v843 = vpack.c.b16 %v735, %v733
      %v844 = vpack.c.b16 %v738, %v736
      %v845 = vpack.c.b16 %v739, %v737
      %v846 = vpack.c.b16 %v742, %v740
      %v847 = vpack.c.b16 %v743, %v741
      %v848 = vpack.c.b16 %v746, %v744
      %v849 = vpack.c.b16 %v747, %v745
      %v850 = vpack.c.b16 %v750, %v748
      %v851 = vpack.c.b16 %v751, %v749
      %v852 = vpack.c.b16 %v754, %v752
      %v853 = vpack.c.b16 %v755, %v753
      %v854 = vpack.c.b16 %v758, %v756
      %v855 = vpack.c.b16 %v759, %v757
      %v856 = vpack.c.b16 %v762, %v760
      %v857 = vpack.c.b16 %v763, %v761
      %v858 = vpack.c.b16 %v766, %v764
      %v859 = vpack.c.b16 %v767, %v765
      %v860 = vpack.c.b16 %v770, %v768
      %v861 = vpack.c.b16 %v771, %v769
      %v862 = vpack.c.b16 %v774, %v772
      %v863 = vpack.c.b16 %v775, %v773
      %v864 = vpack.c.b16 %v778, %v776
      %v865 = vpack.c.b16 %v779, %v777
      %v866 = vpack.c.b16 %v782, %v780
      %v867 = vpack.c.b16 %v783, %v781
      %v868 = vpack.c.b16 %v786, %v784
      %v869 = vpack.c.b16 %v787, %v785
      %v870 = vpack.c.b16 %v790, %v788
      %v871 = vpack.c.b16 %v791, %v789
      %v872 = vpack.c.b16 %v794, %v792
      %v873 = vpack.c.b16 %v795, %v793
      %v874 = vpack.c.b16 %v798, %v796
      %v875 = vpack.c.b16 %v799, %v797
      %v876 = vpack.c.b16 %v802, %v800
      %v877 = vpack.c.b16 %v803, %v801
      %v878 = vpack.c.b16 %v806, %v804
      %v879 = vpack.c.b16 %v807, %v805
      %v880 = vpack.c.b16 %v810, %v808
      %v881 = vpack.c.b16 %v811, %v809
      %v882 = vpack.c.b16 %v814, %v812
      %v883 = vpack.c.b16 %v815, %v813
      %v884 = vpack.c.b16 %v818, %v816
      %v885 = vpack.c.b16 %v819, %v817
      %v886 = vpack.c.b16 %v822, %v820
      %v887 = vpack.c.b16 %v823, %v821
      %952 = vmatpush.bf16.msra.mxu0 %v838
      %953 = vmatpush.bf16.msra.mxu0 %v836
      %954 = vmatpush.bf16.msra.mxu0 %v834
      %955 = vmatpush.bf16.msra.mxu0 %v832
      %956 = vmatpush.bf16.msra.mxu0 %v830
      %957 = vmatpush.bf16.msra.mxu0 %v828
      %958 = vmatpush.bf16.msra.mxu0 %v826
      %959 = vmatpush.bf16.msra.mxu0 %v824
      %960 = vmatmul.bf16.gmra.mxu0 %v546
      %v961 = vpop.f32.mrf.mxu0
      %v962 = vadd.f32 %v628, %v961
      %v963 = vpop.f32.mrf.mxu0
      %v964 = vadd.f32 %v628, %v963
      %965 = vmatmul.bf16.gmra.mxu0 %v550
      %v966 = vpop.f32.mrf.mxu0
      %v967 = vadd.f32 %v628, %v966
      %v968 = vpop.f32.mrf.mxu0
      %v969 = vadd.f32 %v628, %v968
      %970 = vmatmul.bf16.gmra.mxu0 %v554
      %v971 = vpop.f32.mrf.mxu0
      %v972 = vadd.f32 %v628, %v971
      %v973 = vpop.f32.mrf.mxu0
      %v974 = vadd.f32 %v628, %v973
      %975 = vmatmul.bf16.gmra.mxu0 %v558
      %v976 = vpop.f32.mrf.mxu0
      %v977 = vadd.f32 %v628, %v976
      %v978 = vpop.f32.mrf.mxu0
      %v979 = vadd.f32 %v628, %v978
      %980 = vdwg.mxu0
      %981 = vmatpush.bf16.msra.mxu0 %v854
      %982 = vmatpush.bf16.msra.mxu0 %v852
      %983 = vmatpush.bf16.msra.mxu0 %v850
      %984 = vmatpush.bf16.msra.mxu0 %v848
      %985 = vmatpush.bf16.msra.mxu0 %v846
      %986 = vmatpush.bf16.msra.mxu0 %v844
      %987 = vmatpush.bf16.msra.mxu0 %v842
      %988 = vmatpush.bf16.msra.mxu0 %v840
      %989 = vmatmul.bf16.gmra.mxu0 %v547
      %v990 = vpop.f32.mrf.mxu0
      %v991 = vadd.f32 %v962, %v990
      %v992 = vpop.f32.mrf.mxu0
      %v993 = vadd.f32 %v964, %v992
      %994 = vmatmul.bf16.gmra.mxu0 %v551
      %v995 = vpop.f32.mrf.mxu0
      %v996 = vadd.f32 %v967, %v995
      %v997 = vpop.f32.mrf.mxu0
      %v998 = vadd.f32 %v969, %v997
      %999 = vmatmul.bf16.gmra.mxu0 %v555
      %v1000 = vpop.f32.mrf.mxu0
      %v1001 = vadd.f32 %v972, %v1000
      %v1002 = vpop.f32.mrf.mxu0
      %v1003 = vadd.f32 %v974, %v1002
      %1004 = vmatmul.bf16.gmra.mxu0 %v559
      %v1005 = vpop.f32.mrf.mxu0
      %v1006 = vadd.f32 %v977, %v1005
      %v1007 = vpop.f32.mrf.mxu0
      %v1008 = vadd.f32 %v979, %v1007
      %1009 = vdwg.mxu0
      %1010 = vmatpush.bf16.msra.mxu0 %v870
      %1011 = vmatpush.bf16.msra.mxu0 %v868
      %1012 = vmatpush.bf16.msra.mxu0 %v866
      %1013 = vmatpush.bf16.msra.mxu0 %v864
      %1014 = vmatpush.bf16.msra.mxu0 %v862
      %1015 = vmatpush.bf16.msra.mxu0 %v860
      %1016 = vmatpush.bf16.msra.mxu0 %v858
      %1017 = vmatpush.bf16.msra.mxu0 %v856
      %1018 = vmatmul.bf16.gmra.mxu0 %v548
      %v1019 = vpop.f32.mrf.mxu0
      %v1020 = vadd.f32 %v991, %v1019
      %v1021 = vpop.f32.mrf.mxu0
      %v1022 = vadd.f32 %v993, %v1021
      %1023 = vmatmul.bf16.gmra.mxu0 %v552
      %v1024 = vpop.f32.mrf.mxu0
      %v1025 = vadd.f32 %v996, %v1024
      %v1026 = vpop.f32.mrf.mxu0
      %v1027 = vadd.f32 %v998, %v1026
      %1028 = vmatmul.bf16.gmra.mxu0 %v556
      %v1029 = vpop.f32.mrf.mxu0
      %v1030 = vadd.f32 %v1001, %v1029
      %v1031 = vpop.f32.mrf.mxu0
      %v1032 = vadd.f32 %v1003, %v1031
      %1033 = vmatmul.bf16.gmra.mxu0 %v560
      %v1034 = vpop.f32.mrf.mxu0
      %v1035 = vadd.f32 %v1006, %v1034
      %v1036 = vpop.f32.mrf.mxu0
      %v1037 = vadd.f32 %v1008, %v1036
      %1038 = vdwg.mxu0
      %1039 = vmatpush.bf16.msra.mxu0 %v886
      %1040 = vmatpush.bf16.msra.mxu0 %v884
      %1041 = vmatpush.bf16.msra.mxu0 %v882
      %1042 = vmatpush.bf16.msra.mxu0 %v880
      %1043 = vmatpush.bf16.msra.mxu0 %v878
      %1044 = vmatpush.bf16.msra.mxu0 %v876
      %1045 = vmatpush.bf16.msra.mxu0 %v874
      %1046 = vmatpush.bf16.msra.mxu0 %v872
      %1047 = vmatmul.bf16.gmra.mxu0 %v549
      %v1048 = vpop.f32.mrf.mxu0
      %v1049 = vadd.f32 %v1020, %v1048
      %v1050 = vpop.f32.mrf.mxu0
      %v1051 = vadd.f32 %v1022, %v1050
      %1052 = vmatmul.bf16.gmra.mxu0 %v553
      %v1053 = vpop.f32.mrf.mxu0
      %v1054 = vadd.f32 %v1025, %v1053
      %v1055 = vpop.f32.mrf.mxu0
      %v1056 = vadd.f32 %v1027, %v1055
      %1057 = vmatmul.bf16.gmra.mxu0 %v557
      %v1058 = vpop.f32.mrf.mxu0
      %v1059 = vadd.f32 %v1030, %v1058
      %v1060 = vpop.f32.mrf.mxu0
      %v1061 = vadd.f32 %v1032, %v1060
      %1062 = vmatmul.bf16.gmra.mxu0 %v561
      %v1063 = vpop.f32.mrf.mxu0
      %v1064 = vadd.f32 %v1035, %v1063
      %v1065 = vpop.f32.mrf.mxu0
      %v1066 = vadd.f32 %v1037, %v1065
      %1067 = vdwg.mxu0
      %1068 = vmatpush.bf16.msra.mxu0 %v839
      %1069 = vmatpush.bf16.msra.mxu0 %v837
      %1070 = vmatpush.bf16.msra.mxu0 %v835
      %1071 = vmatpush.bf16.msra.mxu0 %v833
      %1072 = vmatpush.bf16.msra.mxu0 %v831
      %1073 = vmatpush.bf16.msra.mxu0 %v829
      %1074 = vmatpush.bf16.msra.mxu0 %v827
      %1075 = vmatpush.bf16.msra.mxu0 %v825
      %1076 = vmatmul.bf16.gmra.mxu0 %v546
      %v1077 = vpop.f32.mrf.mxu0
      %v1078 = vadd.f32 %v629, %v1077
      %v1079 = vpop.f32.mrf.mxu0
      %v1080 = vadd.f32 %v629, %v1079
      %1081 = vmatmul.bf16.gmra.mxu0 %v550
      %v1082 = vpop.f32.mrf.mxu0
      %v1083 = vadd.f32 %v629, %v1082
      %v1084 = vpop.f32.mrf.mxu0
      %v1085 = vadd.f32 %v629, %v1084
      %1086 = vmatmul.bf16.gmra.mxu0 %v554
      %v1087 = vpop.f32.mrf.mxu0
      %v1088 = vadd.f32 %v629, %v1087
      %v1089 = vpop.f32.mrf.mxu0
      %v1090 = vadd.f32 %v629, %v1089
      %1091 = vmatmul.bf16.gmra.mxu0 %v558
      %v1092 = vpop.f32.mrf.mxu0
      %v1093 = vadd.f32 %v629, %v1092
      %v1094 = vpop.f32.mrf.mxu0
      %v1095 = vadd.f32 %v629, %v1094
      %1096 = vdwg.mxu0
      %1097 = vmatpush.bf16.msra.mxu0 %v855
      %1098 = vmatpush.bf16.msra.mxu0 %v853
      %1099 = vmatpush.bf16.msra.mxu0 %v851
      %1100 = vmatpush.bf16.msra.mxu0 %v849
      %1101 = vmatpush.bf16.msra.mxu0 %v847
      %1102 = vmatpush.bf16.msra.mxu0 %v845
      %1103 = vmatpush.bf16.msra.mxu0 %v843
      %1104 = vmatpush.bf16.msra.mxu0 %v841
      %1105 = vmatmul.bf16.gmra.mxu0 %v547
      %v1106 = vpop.f32.mrf.mxu0
      %v1107 = vadd.f32 %v1078, %v1106
      %v1108 = vpop.f32.mrf.mxu0
      %v1109 = vadd.f32 %v1080, %v1108
      %1110 = vmatmul.bf16.gmra.mxu0 %v551
      %v1111 = vpop.f32.mrf.mxu0
      %v1112 = vadd.f32 %v1083, %v1111
      %v1113 = vpop.f32.mrf.mxu0
      %v1114 = vadd.f32 %v1085, %v1113
      %1115 = vmatmul.bf16.gmra.mxu0 %v555
      %v1116 = vpop.f32.mrf.mxu0
      %v1117 = vadd.f32 %v1088, %v1116
      %v1118 = vpop.f32.mrf.mxu0
      %v1119 = vadd.f32 %v1090, %v1118
      %1120 = vmatmul.bf16.gmra.mxu0 %v559
      %v1121 = vpop.f32.mrf.mxu0
      %v1122 = vadd.f32 %v1093, %v1121
      %v1123 = vpop.f32.mrf.mxu0
      %v1124 = vadd.f32 %v1095, %v1123
      %1125 = vdwg.mxu0
      %1126 = vmatpush.bf16.msra.mxu0 %v871
      %1127 = vmatpush.bf16.msra.mxu0 %v869
      %1128 = vmatpush.bf16.msra.mxu0 %v867
      %1129 = vmatpush.bf16.msra.mxu0 %v865
      %1130 = vmatpush.bf16.msra.mxu0 %v863
      %1131 = vmatpush.bf16.msra.mxu0 %v861
      %1132 = vmatpush.bf16.msra.mxu0 %v859
      %1133 = vmatpush.bf16.msra.mxu0 %v857
      %1134 = vmatmul.bf16.gmra.mxu0 %v548
      %v1135 = vpop.f32.mrf.mxu0
      %v1136 = vadd.f32 %v1107, %v1135
      %v1137 = vpop.f32.mrf.mxu0
      %v1138 = vadd.f32 %v1109, %v1137
      %1139 = vmatmul.bf16.gmra.mxu0 %v552
      %v1140 = vpop.f32.mrf.mxu0
      %v1141 = vadd.f32 %v1112, %v1140
      %v1142 = vpop.f32.mrf.mxu0
      %v1143 = vadd.f32 %v1114, %v1142
      %1144 = vmatmul.bf16.gmra.mxu0 %v556
      %v1145 = vpop.f32.mrf.mxu0
      %v1146 = vadd.f32 %v1117, %v1145
      %v1147 = vpop.f32.mrf.mxu0
      %v1148 = vadd.f32 %v1119, %v1147
      %1149 = vmatmul.bf16.gmra.mxu0 %v560
      %v1150 = vpop.f32.mrf.mxu0
      %v1151 = vadd.f32 %v1122, %v1150
      %v1152 = vpop.f32.mrf.mxu0
      %v1153 = vadd.f32 %v1124, %v1152
      %1154 = vdwg.mxu0
      %1155 = vmatpush.bf16.msra.mxu0 %v887
      %1156 = vmatpush.bf16.msra.mxu0 %v885
      %1157 = vmatpush.bf16.msra.mxu0 %v883
      %1158 = vmatpush.bf16.msra.mxu0 %v881
      %1159 = vmatpush.bf16.msra.mxu0 %v879
      %1160 = vmatpush.bf16.msra.mxu0 %v877
      %1161 = vmatpush.bf16.msra.mxu0 %v875
      %1162 = vmatpush.bf16.msra.mxu0 %v873
      %1163 = vmatmul.bf16.gmra.mxu0 %v549
      %v1164 = vpop.f32.mrf.mxu0
      %v1165 = vadd.f32 %v1136, %v1164
      %v1166 = vpop.f32.mrf.mxu0
      %v1167 = vadd.f32 %v1138, %v1166
      %1168 = vmatmul.bf16.gmra.mxu0 %v553
      %v1169 = vpop.f32.mrf.mxu0
      %v1170 = vadd.f32 %v1141, %v1169
      %v1171 = vpop.f32.mrf.mxu0
      %v1172 = vadd.f32 %v1143, %v1171
      %1173 = vmatmul.bf16.gmra.mxu0 %v557
      %v1174 = vpop.f32.mrf.mxu0
      %v1175 = vadd.f32 %v1146, %v1174
      %v1176 = vpop.f32.mrf.mxu0
      %v1177 = vadd.f32 %v1148, %v1176
      %1178 = vmatmul.bf16.gmra.mxu0 %v561
      %v1179 = vpop.f32.mrf.mxu0
      %v1180 = vadd.f32 %v1151, %v1179
      %v1181 = vpop.f32.mrf.mxu0
      %v1182 = vadd.f32 %v1153, %v1181
      %1183 = vdwg.mxu0
      %v1184 = vmax.f32 %v1049, 0.0
      %v1185 = vmax.f32 %v1165, 0.0
      %v1186 = vmax.f32 %v1051, 0.0
      %v1187 = vmax.f32 %v1167, 0.0
      %v1188 = vmax.f32 %v1054, 0.0
      %v1189 = vmax.f32 %v1170, 0.0
      %v1190 = vmax.f32 %v1056, 0.0
      %v1191 = vmax.f32 %v1172, 0.0
      %v1192 = vmax.f32 %v1059, 0.0
      %v1193 = vmax.f32 %v1175, 0.0
      %v1194 = vmax.f32 %v1061, 0.0
      %v1195 = vmax.f32 %v1177, 0.0
      %v1196 = vmax.f32 %v1064, 0.0
      %v1197 = vmax.f32 %v1180, 0.0
      %v1198 = vmax.f32 %v1066, 0.0
      %v1199 = vmax.f32 %v1182, 0.0
      %v1200 = vpack.c.bf16 %v1186, %v1184
      %v1201 = vpack.c.bf16 %v1187, %v1185
      %v1202 = vpack.c.bf16 %v1190, %v1188
      %v1203 = vpack.c.bf16 %v1191, %v1189
      %v1204 = vpack.c.bf16 %v1194, %v1192
      %v1205 = vpack.c.bf16 %v1195, %v1193
      %v1206 = vpack.c.bf16 %v1198, %v1196
      %v1207 = vpack.c.bf16 %v1199, %v1197
      %v1208 = vld [vmem:[%s5] sm:$0xf]
      %v1209 = vld [vmem:[%s5 + $0x4] sm:$0xf]
      %v1210 = vld [vmem:[%s5 + $0x8] sm:$0xf]
      %v1211 = vld [vmem:[%s5 + $0xc] sm:$0xf]
      %v1212 = vld [vmem:[%s5 + $0x10] sm:$0xf]
      %v1213 = vld [vmem:[%s5 + $0x14] sm:$0xf]
      %v1214 = vld [vmem:[%s5 + $0x18] sm:$0xf]
      %v1215 = vld [vmem:[%s5 + $0x1c] sm:$0xf]
      %v1216 = vld [vmem:[%s5 + $0x20] sm:$0xf]
      %v1217 = vld [vmem:[%s5 + $0x24] sm:$0xf]
      %v1218 = vld [vmem:[%s5 + $0x28] sm:$0xf]
      %v1219 = vld [vmem:[%s5 + $0x2c] sm:$0xf]
      %v1220 = vld [vmem:[%s5 + $0x30] sm:$0xf]
      %v1221 = vld [vmem:[%s5 + $0x34] sm:$0xf]
      %v1222 = vld [vmem:[%s5 + $0x38] sm:$0xf]
      %v1223 = vld [vmem:[%s5 + $0x3c] sm:$0xf]
      %v1224 = vld [vmem:[%s5 + $0x40] sm:$0xf]
      %v1225 = vld [vmem:[%s5 + $0x44] sm:$0xf]
      %v1226 = vld [vmem:[%s5 + $0x48] sm:$0xf]
      %v1227 = vld [vmem:[%s5 + $0x4c] sm:$0xf]
      %v1228 = vld [vmem:[%s5 + $0x50] sm:$0xf]
      %v1229 = vld [vmem:[%s5 + $0x54] sm:$0xf]
      %v1230 = vld [vmem:[%s5 + $0x58] sm:$0xf]
      %v1231 = vld [vmem:[%s5 + $0x5c] sm:$0xf]
      %v1232 = vld [vmem:[%s5 + $0x60] sm:$0xf]
      %v1233 = vld [vmem:[%s5 + $0x64] sm:$0xf]
      %v1234 = vld [vmem:[%s5 + $0x68] sm:$0xf]
      %v1235 = vld [vmem:[%s5 + $0x6c] sm:$0xf]
      %v1236 = vld [vmem:[%s5 + $0x70] sm:$0xf]
      %v1237 = vld [vmem:[%s5 + $0x74] sm:$0xf]
      %v1238 = vld [vmem:[%s5 + $0x78] sm:$0xf]
      %v1239 = vld [vmem:[%s5 + $0x7c] sm:$0xf]
      %v1240 = vld [vmem:[%s6] sm:$0x1]
      %v1242 = vperm.slane %v1240, 0
      %v1276 = vunpack.c.l.b16 %v1208
      %v1277 = vunpack.c.l.b16 %v1209
      %v1278 = vunpack.c.l.b16 %v1210
      %v1279 = vunpack.c.l.b16 %v1211
      %v1280 = vunpack.c.l.b16 %v1212
      %v1281 = vunpack.c.l.b16 %v1213
      %v1282 = vunpack.c.l.b16 %v1214
      %v1283 = vunpack.c.l.b16 %v1215
      %v1284 = vunpack.c.l.b16 %v1216
      %v1285 = vunpack.c.l.b16 %v1217
      %v1286 = vunpack.c.l.b16 %v1218
      %v1287 = vunpack.c.l.b16 %v1219
      %v1288 = vunpack.c.l.b16 %v1220
      %v1289 = vunpack.c.l.b16 %v1221
      %v1290 = vunpack.c.l.b16 %v1222
      %v1291 = vunpack.c.l.b16 %v1223
      %v1292 = vunpack.c.l.b16 %v1224
      %v1293 = vunpack.c.l.b16 %v1225
      %v1294 = vunpack.c.l.b16 %v1226
      %v1295 = vunpack.c.l.b16 %v1227
      %v1296 = vunpack.c.l.b16 %v1228
      %v1297 = vunpack.c.l.b16 %v1229
      %v1298 = vunpack.c.l.b16 %v1230
      %v1299 = vunpack.c.l.b16 %v1231
      %v1300 = vunpack.c.l.b16 %v1232
      %v1301 = vunpack.c.l.b16 %v1233
      %v1302 = vunpack.c.l.b16 %v1234
      %v1303 = vunpack.c.l.b16 %v1235
      %v1304 = vunpack.c.l.b16 %v1236
      %v1305 = vunpack.c.l.b16 %v1237
      %v1306 = vunpack.c.l.b16 %v1238
      %v1307 = vunpack.c.l.b16 %v1239
      %v1308 = vpack.c.b16 %v1277, %v1276
      %v1309 = vpack.c.b16 %v1279, %v1278
      %v1310 = vpack.c.b16 %v1281, %v1280
      %v1311 = vpack.c.b16 %v1283, %v1282
      %v1312 = vpack.c.b16 %v1285, %v1284
      %v1313 = vpack.c.b16 %v1287, %v1286
      %v1314 = vpack.c.b16 %v1289, %v1288
      %v1315 = vpack.c.b16 %v1291, %v1290
      %v1316 = vpack.c.b16 %v1293, %v1292
      %v1317 = vpack.c.b16 %v1295, %v1294
      %v1318 = vpack.c.b16 %v1297, %v1296
      %v1319 = vpack.c.b16 %v1299, %v1298
      %v1320 = vpack.c.b16 %v1301, %v1300
      %v1321 = vpack.c.b16 %v1303, %v1302
      %v1322 = vpack.c.b16 %v1305, %v1304
      %v1323 = vpack.c.b16 %v1307, %v1306
      %1340 = vmatpush.bf16.msra.mxu0 %v1315
      %1341 = vmatpush.bf16.msra.mxu0 %v1314
      %1342 = vmatpush.bf16.msra.mxu0 %v1313
      %1343 = vmatpush.bf16.msra.mxu0 %v1312
      %1344 = vmatpush.bf16.msra.mxu0 %v1311
      %1345 = vmatpush.bf16.msra.mxu0 %v1310
      %1346 = vmatpush.bf16.msra.mxu0 %v1309
      %1347 = vmatpush.bf16.msra.mxu0 %v1308
      %1348 = vmatmul.bf16.gmra.mxu0 %v1200
      %v1349 = vpop.f32.mrf.mxu0
      %v1350 = vadd.f32 %v1242, %v1349
      %v1351 = vpop.f32.mrf.mxu0
      %v1352 = vadd.f32 %v1242, %v1351
      %1353 = vmatmul.bf16.gmra.mxu0 %v1202
      %v1354 = vpop.f32.mrf.mxu0
      %v1355 = vadd.f32 %v1242, %v1354
      %v1356 = vpop.f32.mrf.mxu0
      %v1357 = vadd.f32 %v1242, %v1356
      %1358 = vmatmul.bf16.gmra.mxu0 %v1204
      %v1359 = vpop.f32.mrf.mxu0
      %v1360 = vadd.f32 %v1242, %v1359
      %v1361 = vpop.f32.mrf.mxu0
      %v1362 = vadd.f32 %v1242, %v1361
      %1363 = vmatmul.bf16.gmra.mxu0 %v1206
      %v1364 = vpop.f32.mrf.mxu0
      %v1365 = vadd.f32 %v1242, %v1364
      %v1366 = vpop.f32.mrf.mxu0
      %v1367 = vadd.f32 %v1242, %v1366
      %1368 = vdwg.mxu0
      %1369 = vmatpush.bf16.msra.mxu0 %v1323
      %1370 = vmatpush.bf16.msra.mxu0 %v1322
      %1371 = vmatpush.bf16.msra.mxu0 %v1321
      %1372 = vmatpush.bf16.msra.mxu0 %v1320
      %1373 = vmatpush.bf16.msra.mxu0 %v1319
      %1374 = vmatpush.bf16.msra.mxu0 %v1318
      %1375 = vmatpush.bf16.msra.mxu0 %v1317
      %1376 = vmatpush.bf16.msra.mxu0 %v1316
      %1377 = vmatmul.bf16.gmra.mxu0 %v1201
      %v1378 = vpop.f32.mrf.mxu0
      %v1379 = vadd.f32 %v1350, %v1378
      %v1380 = vpop.f32.mrf.mxu0
      %v1381 = vadd.f32 %v1352, %v1380
      %1382 = vmatmul.bf16.gmra.mxu0 %v1203
      %v1383 = vpop.f32.mrf.mxu0
      %v1384 = vadd.f32 %v1355, %v1383
      %v1385 = vpop.f32.mrf.mxu0
      %v1386 = vadd.f32 %v1357, %v1385
      %1387 = vmatmul.bf16.gmra.mxu0 %v1205
      %v1388 = vpop.f32.mrf.mxu0
      %v1389 = vadd.f32 %v1360, %v1388
      %v1390 = vpop.f32.mrf.mxu0
      %v1391 = vadd.f32 %v1362, %v1390
      %1392 = vmatmul.bf16.gmra.mxu0 %v1207
      %v1393 = vpop.f32.mrf.mxu0
      %v1394 = vadd.f32 %v1365, %v1393
      %v1395 = vpop.f32.mrf.mxu0
      %v1396 = vadd.f32 %v1367, %v1395
      %1397 = vdwg.mxu0
      %v1398 = vmax.f32 %v1379, 0.0
      %v1399 = vmax.f32 %v1381, 0.0
      %v1400 = vmax.f32 %v1384, 0.0
      %v1401 = vmax.f32 %v1386, 0.0
      %v1402 = vmax.f32 %v1389, 0.0
      %v1403 = vmax.f32 %v1391, 0.0
      %v1404 = vmax.f32 %v1394, 0.0
      %v1405 = vmax.f32 %v1396, 0.0
      %v1406 = vld [vmem:[%s7] sm:$0x1]
      %v1408 = vperm.slane %v1406, 0
      %v1410 = vmul.f32 %v1398, %v1408
      %v1411 = vmul.f32 %v1399, %v1408
      %v1412 = vmul.f32 %v1400, %v1408
      %v1413 = vmul.f32 %v1401, %v1408
      %v1414 = vmul.f32 %v1402, %v1408
      %v1415 = vmul.f32 %v1403, %v1408
      %v1416 = vmul.f32 %v1404, %v1408
      %v1417 = vmul.f32 %v1405, %v1408
      %vm1418 = vcmask 523264
      %v1419 = vsel %vm1418, %v1410, 0.0
      %1420 = vadd.xlane.f32.xlu0 %v1419
      %v1421 = vpop.xlane.xlu0 %1420
      %v1422 = vsel %vm1418, %v1411, 0.0
      %1423 = vadd.xlane.f32.xlu0 %v1422
      %v1424 = vpop.xlane.xlu0 %1423
      %v1425 = vsel %vm1418, %v1412, 0.0
      %1426 = vadd.xlane.f32.xlu0 %v1425
      %v1427 = vpop.xlane.xlu0 %1426
      %v1428 = vsel %vm1418, %v1413, 0.0
      %1429 = vadd.xlane.f32.xlu0 %v1428
      %v1430 = vpop.xlane.xlu0 %1429
      %v1431 = vsel %vm1418, %v1414, 0.0
      %1432 = vadd.xlane.f32.xlu0 %v1431
      %v1433 = vpop.xlane.xlu0 %1432
      %v1434 = vsel %vm1418, %v1415, 0.0
      %1435 = vadd.xlane.f32.xlu0 %v1434
      %v1436 = vpop.xlane.xlu0 %1435
      %v1437 = vsel %vm1418, %v1416, 0.0
      %1438 = vadd.xlane.f32.xlu0 %v1437
      %v1439 = vpop.xlane.xlu0 %1438
      %v1440 = vsel %vm1418, %v1417, 0.0
      %1441 = vadd.xlane.f32.xlu0 %v1440
      %v1442 = vpop.xlane.xlu0 %1441
      %v1443 = vld [vmem:[#allocation2] sm:$0x1]
      %v1445 = vperm.slane %v1443, 0
      %v1447 = vadd.f32 %v1421, %v1445
      %v1448 = vadd.f32 %v1424, %v1445
      %v1449 = vadd.f32 %v1427, %v1445
      %v1450 = vadd.f32 %v1430, %v1445
      %v1451 = vadd.f32 %v1433, %v1445
      %v1452 = vadd.f32 %v1436, %v1445
      %v1453 = vadd.f32 %v1439, %v1445
      %v1454 = vadd.f32 %v1442, %v1445
      %vm1455 = vcmask 7168
      %1456 = vst.msk [vmem:[%s336] sm:$0xff] %vm1455, %v1447
      %1457 = vst.msk [vmem:[%s336 + $0x8] sm:$0xff] %vm1455, %v1448
      %1458 = vst.msk [vmem:[%s336 + $0x10] sm:$0xff] %vm1455, %v1449
      %1459 = vst.msk [vmem:[%s336 + $0x18] sm:$0xff] %vm1455, %v1450
      %1460 = vst.msk [vmem:[%s336 + $0x20] sm:$0xff] %vm1455, %v1451
      %1461 = vst.msk [vmem:[%s336 + $0x28] sm:$0xff] %vm1455, %v1452
      %1462 = vst.msk [vmem:[%s336 + $0x30] sm:$0xff] %vm1455, %v1453
      %1463 = vst.msk [vmem:[%s336 + $0x38] sm:$0xff] %vm1455, %v1454
      %s1464 = smul.u32 8, %s22
      %p1465 = scmp.lt.s32.totalorder %s1464, 31
      %s1466 = scalar_select %p1465, %s1464, 31
      %s1467 = smul.addr %s1466, 8
      %s1468 = scalar_lea.vmem %s9, %s1467
      // Predicated region
      $region57: #{condition_dmodel_forward.1} parent=55 // pred_check
        %p1469 = pneg %p234
      $region58: #{condition_dmodel_forward.1} parent=55 // pred_check_branch
        %1471 = sbr.rel (%p1469) target = $region60
      $region59: #{condition_dmodel_forward.1} parent=55 // pred_region
        %s1472 = smul.u32 8, %s22
      $region60: #{condition_dmodel_forward.1} parent=55 // pred_fallthru
        _
    $region56: #{condition_dmodel_forward.1} parent=5 // pred_fallthru
      _
    %p1473 = scmp.le.s32.totalorder 2, %s17
    // Predicated region
    $region61: #{condition_dmodel_forward.1} parent=5 // pred_check
      %p1474 = pneg %p1473
    $region62: #{condition_dmodel_forward.1} parent=5 // pred_check_branch
      %1476 = sbr.rel (%p1474) target = $region64
    $region63: #{condition_dmodel_forward.1} parent=5 // pred_region
      %s1477 = ssub.s32 %s17, 2
      // Predicated region
      $region65: #{condition_dmodel_forward.1} parent=63 // pred_check
        %p1478 = pneg %p240
      $region66: #{condition_dmodel_forward.1} parent=63 // pred_check_branch
        %1480 = sbr.rel (%p1478) target = $region68
      $region67: #{condition_dmodel_forward.1} parent=63 // pred_region
        %s1481 = smul.u32 8, %s23
        %p1482 = scmp.lt.s32.totalorder %s1481, 31
        %s1483 = scalar_select %p1482, %s1481, 31
        %s1484 = smul.addr %s1483, 8
        %s1485 = scalar_lea.vmem %s9, %s1484
      $region68: #{condition_dmodel_forward.1} parent=63 // pred_fallthru
        _
    $region64: #{condition_dmodel_forward.1} parent=5 // pred_fallthru
      _
  $region6: #{condition_dmodel_forward.1} parent=0 // loop_footer
    %s21 = sadd.s32 1, %s17
  $region7: #{condition_dmodel_forward.1} parent=0 // loop_footer_branch
    %16 = sbr.rel target = $region3
  $region8: #{condition_dmodel_forward.1} parent=0 // loop_exit
    _

</llo_original>
